<compile_context>
chip_gen: v6e
topology: v6e:2x2x1
jax: 0.10.0
libtpu: 0.0.40
codegen_flags: <defaults>
</compile_context>

<pallas_src>
import functools

import jax
import jax.numpy as jnp
from jax.experimental import pallas as pl
from jax.experimental.pallas import tpu as pltpu


def _round_up(x, m):
    return ((x + m - 1) // m) * m


def _pick_tile_m(mp8, max_tile_m=128):
    """Row tile: a sublane-aligned divisor of mp8, capped at max_tile_m (keeps
    the f32 intermediate inside the vreg file), preferring >=2 grid steps so
    the 'parallel' grid axis can shard rows across v7x's two TensorCores."""
    cap = min(mp8, max_tile_m)
    divs = [t for t in range(8, cap + 1, 8) if mp8 % t == 0]
    if not divs:
        return mp8
    two_step = [t for t in divs if mp8 // t >= 2]
    if mp8 >= 16 and two_step:
        return max(two_step)
    return max(divs)


# ------------------------------ Pallas kernel ------------------------------

def _mlp_kernel(x_ref, w1_ref, w2_ref, o_ref):
    # x_ref : (tm, D)   bf16
    # w1_ref: (D, Hp)   bf16   (Hp = round_up(4*D, 128) -> lane-dense intermediate)
    # w2_ref: (Hp, Np)  bf16   (Np = round_up(D, 128)   -> unmasked vst epilogue)
    # o_ref : (tm, Np)  bf16
    h = jnp.dot(x_ref[...], w1_ref[...], preferred_element_type=jnp.float32)
    h = h * jax.nn.sigmoid(h)                       # SiLU in f32 (VPU + EUP)
    o_ref[...] = jnp.dot(h.astype(jnp.bfloat16), w2_ref[...],
                         preferred_element_type=jnp.float32).astype(o_ref.dtype)


def decoder_mlp_forward(x, w1_bf16, w2_bf16, out_dim, *, max_tile_m=128):
    """x: (..., D) f32.  Returns (..., out_dim) f32 (inference: dropout = identity)."""
    *lead, D = x.shape
    x2 = x.reshape(-1, D).astype(jnp.bfloat16)      # stream x in bf16 (half the bytes)
    M = x2.shape[0]

    Mp = _round_up(max(M, 1), 8)                    # pad rows only to the sublane (<=7 waste)
    if Mp != M:
        x2 = jnp.pad(x2, ((0, Mp - M), (0, 0)))
    tm = _pick_tile_m(Mp, max_tile_m)

    Hp = w1_bf16.shape[1]                           # multiple of 128
    Np = w2_bf16.shape[1]                           # multiple of 128 (lane-dense output)

    out = pl.pallas_call(
        _mlp_kernel,
        out_shape=jax.ShapeDtypeStruct((Mp, Np), jnp.bfloat16),
        grid=(Mp // tm,),
        in_specs=[
            pl.BlockSpec((tm, D), lambda i: (i, 0)),    # rows tiled over the grid
            pl.BlockSpec((D, Hp), lambda i: (0, 0)),    # weights resident across steps
            pl.BlockSpec((Hp, Np), lambda i: (0, 0)),
        ],
        out_specs=pl.BlockSpec((tm, Np), lambda i: (i, 0)),
        compiler_params=pltpu.CompilerParams(
            dimension_semantics=("parallel",),          # shard row tiles across TCs (v7x)
        ),
    )(x2, w1_bf16, w2_bf16)

    out = out[:M, :out_dim].astype(jnp.float32)
    # TODO(synk): nn.Dropout is implemented as inference-mode identity; train-mode
    # stochastic masking would use pltpu.prng_seed / prng_random_bits in-kernel.
    return out.reshape(*lead, out_dim)


# ------------------------------ params / packing ------------------------------

def init_decoder_mlp_params(key, d):
    k1, k2 = jax.random.split(key)
    h = 4 * d
    scale = 0.02
    # (in, out) layout == PyTorch linear.weight.T
    w1 = (scale * jax.random.normal(k1, (d, h))).astype(jnp.float32)
    w2 = (scale * jax.random.normal(k2, (h, d))).astype(jnp.float32)
    return {"w1": w1, "w2": w2}


def pack_weights_for_kernel(params):
    """bf16 MXU weights; pad hidden dim and output dim to multiples of 128 lanes.

    Zero-padded w1 columns -> padded lanes of h are exactly 0 (SiLU(0)=0); the
    matching zero w2 rows contribute nothing, so results are unchanged.
    """
    d, h = params["w1"].shape
    hp = _round_up(h, 128)
    np_ = _round_up(d, 128)
    w1 = jnp.pad(params["w1"], ((0, 0), (0, hp - h))).astype(jnp.bfloat16)
    w2 = jnp.pad(params["w2"], ((0, hp - h), (0, np_ - d))).astype(jnp.bfloat16)
    return w1, w2


def decoder_mlp_reference(x, params):
    h = x @ params["w1"]
    h = h * jax.nn.sigmoid(h)
    return h @ params["w2"]


# ----------------------------------- main -----------------------------------

if __name__ == "__main__":
    class ModelArgs:
        decoder_audio_hidden_dim = 48
        decoder_audio_mlp_dropout = 0.0   # inference: identity

    args = ModelArgs()

    key = jax.random.PRNGKey(0)
    kp, kx = jax.random.split(key)
    params = init_decoder_mlp_params(kp, args.decoder_audio_hidden_dim)
    w1_bf16, w2_bf16 = pack_weights_for_kernel(params)

    B, L = 2, 8
    x = jax.random.normal(kx, (B, L, args.decoder_audio_hidden_dim), dtype=jnp.float32)

    fwd = jax.jit(functools.partial(decoder_mlp_forward,
                                    out_dim=args.decoder_audio_hidden_dim))
    y = fwd(x, w1_bf16, w2_bf16)
    jax.block_until_ready(y)

    y_ref = decoder_mlp_reference(x, params)
    assert y.shape == (B, L, args.decoder_audio_hidden_dim)
    max_err = float(jnp.max(jnp.abs(y - y_ref)))
    assert jnp.allclose(y, y_ref, atol=1e-2, rtol=5e-2), f"max_err={max_err}"

    print("KERNEL_OK")
</pallas_src>

<mosaic_0001>
module attributes {stable_mosaic.version = 11 : i64} {
  func.func @_mlp_kernel(%arg0: i32, %arg1: memref<8x48xbf16, #tpu.memory_space<vmem>>, %arg2: memref<48x256xbf16, #tpu.memory_space<vmem>>, %arg3: memref<256x128xbf16, #tpu.memory_space<vmem>>, %arg4: memref<8x128xbf16, #tpu.memory_space<vmem>>) attributes {dimension_semantics = [#tpu.dimension_semantics<parallel>], iteration_bounds = array<i64: 2>, scalar_prefetch = 0 : i64, scratch_operands = 0 : i64, tpu.core_type = #tpu.core_type<tc>, window_params = [{transform_indices = @transform_0, window_bounds = array<i64: 8, 48>}, {pipeline_mode = #tpu.pipeline_mode<synchronous>, transform_indices = @transform_1, window_bounds = array<i64: 48, 256>}, {pipeline_mode = #tpu.pipeline_mode<synchronous>, transform_indices = @transform_2, window_bounds = array<i64: 256, 128>}, {transform_indices = @transform_3, window_bounds = array<i64: 8, 128>}]} {
    %c0 = arith.constant 0 : index
    %c0_0 = arith.constant 0 : index
    %0 = vector.load %arg1[%c0, %c0_0] : memref<8x48xbf16, #tpu.memory_space<vmem>>, vector<8x48xbf16>
    %c0_1 = arith.constant 0 : index
    %c0_2 = arith.constant 0 : index
    %1 = vector.load %arg2[%c0_1, %c0_2] : memref<48x256xbf16, #tpu.memory_space<vmem>>, vector<48x256xbf16>
    %cst = arith.constant dense<0.000000e+00> : vector<8x256xf32>
    %2 = tpu.matmul %0, %1, %cst {dimension_numbers = #tpu.dot_dimension_numbers<[1], [0], [0], [1], [0, 0, 1, 1], [], []>} : vector<8x48xbf16>, vector<48x256xbf16>, vector<8x256xf32> -> vector<8x256xf32>
    %3 = arith.negf %2 : vector<8x256xf32>
    %4 = math.exp %3 : vector<8x256xf32>
    %cst_3 = arith.constant 1.000000e+00 : f32
    %5 = vector.broadcast %cst_3 : f32 to vector<8x256xf32>
    %6 = arith.addf %5, %4 : vector<8x256xf32>
    %7 = arith.divf %5, %6 : vector<8x256xf32>
    %8 = arith.mulf %2, %7 : vector<8x256xf32>
    %9 = arith.truncf %8 : vector<8x256xf32> to vector<8x256xbf16>
    %c0_4 = arith.constant 0 : index
    %c0_5 = arith.constant 0 : index
    %10 = vector.load %arg3[%c0_4, %c0_5] : memref<256x128xbf16, #tpu.memory_space<vmem>>, vector<256x128xbf16>
    %cst_6 = arith.constant dense<0.000000e+00> : vector<8x128xf32>
    %11 = tpu.matmul %9, %10, %cst_6 {dimension_numbers = #tpu.dot_dimension_numbers<[1], [0], [0], [1], [0, 0, 1, 1], [], []>} : vector<8x256xbf16>, vector<256x128xbf16>, vector<8x128xf32> -> vector<8x128xf32>
    %12 = arith.truncf %11 : vector<8x128xf32> to vector<8x128xbf16>
    %c0_7 = arith.constant 0 : index
    %c0_8 = arith.constant 0 : index
    %13 = vector.load %arg4[%c0_7, %c0_8] : memref<8x128xbf16, #tpu.memory_space<vmem>>, vector<8x128xbf16>
    tpu.vector_store %arg4[%c0_7, %c0_8], %12 {strides = array<i32>} : memref<8x128xbf16, #tpu.memory_space<vmem>>, vector<8x128xbf16>,
    return
  }
  func.func @transform_0(%arg0: i32) -> (i32, i32) {
    %c0_i32 = arith.constant 0 : i32
    %c0_i32_0 = arith.constant 0 : i32
    return %arg0, %c0_i32 : i32, i32
  }
  func.func @transform_1(%arg0: i32) -> (i32, i32) {
    %c0_i32 = arith.constant 0 : i32
    %c0_i32_0 = arith.constant 0 : i32
    %c0_i32_1 = arith.constant 0 : i32
    return %c0_i32, %c0_i32_0 : i32, i32
  }
  func.func @transform_2(%arg0: i32) -> (i32, i32) {
    %c0_i32 = arith.constant 0 : i32
    %c0_i32_0 = arith.constant 0 : i32
    %c0_i32_1 = arith.constant 0 : i32
    return %c0_i32, %c0_i32_0 : i32, i32
  }
  func.func @transform_3(%arg0: i32) -> (i32, i32) {
    %c0_i32 = arith.constant 0 : i32
    %c0_i32_0 = arith.constant 0 : i32
    return %arg0, %c0_i32 : i32, i32
  }
}

</mosaic_0001>

<llo_original>
// kernel: decoder_mlp_forward.1
$region0: #{decoder_mlp_forward.1}
  #allocation0 [shape = 'u32[]', space=smem, size = 0x4, offset = 0x4, fixed_abs, tag = 'smem constant byte address 0x4 - core index']
  #allocation1 [shape = 'u32[144,128]{1,0:T(1,128)}', space=vmem, size = 0x12000, scoped, tag = 'internal scratch']
  %s0 = inlined_call_operand.vmem [shape: bf16[16,48], index: 0, kind: input, shape index: {}]
  %s1 = inlined_call_operand.hbm [shape: bf16[48,256], index: 1, kind: input, shape index: {}]
  %s2 = inlined_call_operand.hbm [shape: bf16[256,128], index: 2, kind: input, shape index: {}]
  %s3 = inlined_call_operand.vmem [shape: bf16[16,128], index: 3, kind: output, shape index: {}]
  %s4 = sld [smem:[#allocation0]]
  $region53: #{decoder_mlp_forward.1} parent=0
    _
  %s6 = ssub.s32 1, %s4
  %s7 = scalar_select 0, %s6, %s4
  $region1: #{decoder_mlp_forward.1} parent=0
    #allocation2 [shape = 'u8[24576]{0}', space=vmem, size = 0x6000, scoped, tag = 'input window, operand 1, single buffered']
    #allocation3 [shape = 's32[2]{0}', space=sflag, size = 0x8, scoped, tag = 'scoped memory for decoder_mlp_forward.1']
    #allocation4 [shape = 'u8[65536]{0}', space=vmem, size = 0x10000, scoped, tag = 'input window, operand 2, single buffered']
    #allocation5 [shape = 's32[1]{0}', space=sflag, size = 0x4, scoped, tag = 'scoped memory for decoder_mlp_forward.1']
    %8 = vsyncpa [#allocation3], 0
    %9 = vsyncpa [#allocation5], 0
    loop: start=0, step=1, limit=4
    $region2: #{decoder_mlp_forward.1} parent=1 // loop_pre_header
      _
    $region3: #{decoder_mlp_forward.1} parent=1 // loop_header
      %s11 = sphi 0, %s15
      %p12 = scmp.ge.s32.totalorder %s11, 4
      %s21 = sphi 0, %s23
      %s24 = sphi 0, %s21
      %s25 = sphi 0, %s24
      %s41 = sphi 0, %s25
      %s45 = sphi 0, %s45
      %s47 = sphi 0, %s45
      %s48 = sphi 0, %s47
      %s62 = sphi 0, %s48
      %s66 = sphi 0, %s66
      %s68 = sphi 0, %s66
      %s69 = sphi 0, %s68
      %s83 = sphi 0, %s69
      %s89 = sphi 0, %s91
      %s92 = sphi 0, %s89
      %s93 = sphi 0, %s92
      %s109 = sphi 0, %s93
    $region4: #{decoder_mlp_forward.1} parent=1 // loop_header_branch
      %14 = sbr.rel (%p12) target = $region8
    $region5: #{decoder_mlp_forward.1} parent=1 // loop_body
      %s16 = ssub.s32 %s11, 1
      %s17 = ssub.s32 %s11, 2
      %s18 = sadd.s32 %s11, 1
      %s19 = ssub.s32 %s11, %s18
      %p20 = scmp.eq.s32.totalorder %s19, 0
      %s22 = sadd.s32 %s21, 1
      %s23 = scalar_select %p20, %s21, %s22
      %p26 = pneg %p20
      %p27 = scmp.eq.s32.totalorder %s11, 1
      %p28 = por %p26, %p27
      %p29 = scmp.ne.s32.totalorder %s21, %s24
      %p30 = scmp.eq.s32.totalorder %s11, 0
      %p31 = por %p29, %p30
      %p32 = scmp.ne.s32.totalorder %s21, %s24
      %p33 = scmp.eq.s32.totalorder %s16, 1
      %p34 = por %p32, %p33
      %p35 = scmp.ne.s32.totalorder %s24, %s25
      %p36 = scmp.eq.s32.totalorder %s16, 0
      %p37 = por %p35, %p36
      %p38 = scmp.ne.s32.totalorder %s24, %s25
      %p39 = scmp.eq.s32.totalorder %s17, 1
      %p40 = por %p38, %p39
      %p42 = scmp.ne.s32.totalorder %s25, %s41
      %p43 = scmp.eq.s32.totalorder %s17, 0
      %p44 = por %p42, %p43
      %s46 = sadd.s32 %s45, 1
      %p49 = scmp.eq.s32.totalorder %s11, 1
      %p50 = scmp.ne.s32.totalorder %s45, %s47
      %p51 = scmp.eq.s32.totalorder %s11, 0
      %p52 = por %p50, %p51
      %p53 = scmp.ne.s32.totalorder %s45, %s47
      %p54 = scmp.eq.s32.totalorder %s16, 1
      %p55 = por %p53, %p54
      %p56 = scmp.ne.s32.totalorder %s47, %s48
      %p57 = scmp.eq.s32.totalorder %s16, 0
      %p58 = por %p56, %p57
      %p59 = scmp.ne.s32.totalorder %s47, %s48
      %p60 = scmp.eq.s32.totalorder %s17, 1
      %p61 = por %p59, %p60
      %p63 = scmp.ne.s32.totalorder %s48, %s62
      %p64 = scmp.eq.s32.totalorder %s17, 0
      %p65 = por %p63, %p64
      %s67 = sadd.s32 %s66, 1
      %p70 = scmp.eq.s32.totalorder %s11, 1
      %p71 = scmp.ne.s32.totalorder %s66, %s68
      %p72 = scmp.eq.s32.totalorder %s11, 0
      %p73 = por %p71, %p72
      %p74 = scmp.ne.s32.totalorder %s66, %s68
      %p75 = scmp.eq.s32.totalorder %s16, 1
      %p76 = por %p74, %p75
      %p77 = scmp.ne.s32.totalorder %s68, %s69
      %p78 = scmp.eq.s32.totalorder %s16, 0
      %p79 = por %p77, %p78
      %p80 = scmp.ne.s32.totalorder %s68, %s69
      %p81 = scmp.eq.s32.totalorder %s17, 1
      %p82 = por %p80, %p81
      %p84 = scmp.ne.s32.totalorder %s69, %s83
      %p85 = scmp.eq.s32.totalorder %s17, 0
      %p86 = por %p84, %p85
      %s87 = ssub.s32 %s11, %s18
      %p88 = scmp.eq.s32.totalorder %s87, 0
      %s90 = sadd.s32 %s89, 1
      %s91 = scalar_select %p88, %s89, %s90
      %p94 = pneg %p88
      %p95 = scmp.eq.s32.totalorder %s11, 1
      %p96 = por %p94, %p95
      %p97 = scmp.ne.s32.totalorder %s89, %s92
      %p98 = scmp.eq.s32.totalorder %s11, 0
      %p99 = por %p97, %p98
      %p100 = scmp.ne.s32.totalorder %s89, %s92
      %p101 = scmp.eq.s32.totalorder %s16, 1
      %p102 = por %p100, %p101
      %p103 = scmp.ne.s32.totalorder %s92, %s93
      %p104 = scmp.eq.s32.totalorder %s16, 0
      %p105 = por %p103, %p104
      %p106 = scmp.ne.s32.totalorder %s92, %s93
      %p107 = scmp.eq.s32.totalorder %s17, 1
      %p108 = por %p106, %p107
      %p110 = scmp.ne.s32.totalorder %s93, %s109
      %p111 = scmp.eq.s32.totalorder %s17, 0
      %p112 = por %p110, %p111
      %p113 = scmp.le.s32.totalorder 1, %s11
      %p114 = scmp.lt.s32.totalorder %s11, 3
      %p115 = pnand %p113, %p114
      %p116 = pneg %p115
      // Predicated region
      $region9: #{decoder_mlp_forward.1} parent=5 // pred_check
        _
      $region10: #{decoder_mlp_forward.1} parent=5 // pred_check_branch
        %118 = sbr.rel (%p115) target = $region12
      $region11: #{decoder_mlp_forward.1} parent=5 // pred_region
        %s119 = ssub.s32 %s11, 1
        // Predicated region
        $region13: #{decoder_mlp_forward.1} parent=11 // pred_check
          %p120 = pneg %p58
        $region14: #{decoder_mlp_forward.1} parent=11 // pred_check_branch
          %122 = sbr.rel (%p120) target = $region16
        $region15: #{decoder_mlp_forward.1} parent=11 // pred_region
          %s124 = ssub.s32 768, 768
          %125 = vsyncadd [#allocation3], %s124
          %s126 = sshll.u32 [#allocation2], 4
          %s127 = int_to_ptr.vmem [resolvable:$true] %s126
          %132 = dma.hbm_to_vmem [thread:$0]  %s1, 768, %s127, [#allocation3], 128, 128, 8
        $region16: #{decoder_mlp_forward.1} parent=11 // pred_fallthru
          _
        // Predicated region
        $region17: #{decoder_mlp_forward.1} parent=11 // pred_check
          %p133 = pneg %p79
        $region18: #{decoder_mlp_forward.1} parent=11 // pred_check_branch
          %135 = sbr.rel (%p133) target = $region20
        $region19: #{decoder_mlp_forward.1} parent=11 // pred_region
          %s137 = ssub.s32 2048, 2048
          %138 = vsyncadd [#allocation5], %s137
          %s139 = sshll.u32 [#allocation4], 4
          %s140 = int_to_ptr.vmem [resolvable:$true] %s139
          %145 = dma.hbm_to_vmem [thread:$0]  %s2, 2048, %s140, [#allocation5], 64, 64, 4
        $region20: #{decoder_mlp_forward.1} parent=11 // pred_fallthru
          _
      $region12: #{decoder_mlp_forward.1} parent=5 // pred_fallthru
        _
      %p146 = scmp.lt.s32.totalorder %s11, 2
      // Predicated region
      $region21: #{decoder_mlp_forward.1} parent=5 // pred_check
        %p147 = pneg %p146
      $region22: #{decoder_mlp_forward.1} parent=5 // pred_check_branch
        %149 = sbr.rel (%p147) target = $region24
      $region23: #{decoder_mlp_forward.1} parent=5 // pred_region
        // Predicated region
        $region25: #{decoder_mlp_forward.1} parent=23 // pred_check
          %p150 = pneg %p31
        $region26: #{decoder_mlp_forward.1} parent=23 // pred_check_branch
          %152 = sbr.rel (%p150) target = $region28
        $region27: #{decoder_mlp_forward.1} parent=23 // pred_region
          %p153 = scmp.lt.s32.totalorder %s11, 1
          %s154 = scalar_select %p153, %s11, 1
          %s155 = smul.addr %s154, 4
          %s156 = scalar_lea.vmem %s0, %s155
        $region28: #{decoder_mlp_forward.1} parent=23 // pred_fallthru
          _
      $region24: #{decoder_mlp_forward.1} parent=5 // pred_fallthru
        _
      %p157 = scmp.le.s32.totalorder 1, %s11
      %p158 = scmp.lt.s32.totalorder %s11, 3
      %p159 = pnand %p157, %p158
      %p160 = pneg %p159
      // Predicated region
      $region29: #{decoder_mlp_forward.1} parent=5 // pred_check
        _
      $region30: #{decoder_mlp_forward.1} parent=5 // pred_check_branch
        %162 = sbr.rel (%p159) target = $region32
      $region31: #{decoder_mlp_forward.1} parent=5 // pred_region
        %s163 = ssub.s32 %s11, 1
        // Predicated region
        $region33: #{decoder_mlp_forward.1} parent=31 // pred_check
          %p164 = pneg %p58
        $region34: #{decoder_mlp_forward.1} parent=31 // pred_check_branch
          %166 = sbr.rel (%p164) target = $region36
        $region35: #{decoder_mlp_forward.1} parent=31 // pred_region
          %167 = dma.done [#allocation3], 768
        $region36: #{decoder_mlp_forward.1} parent=31 // pred_fallthru
          _
        // Predicated region
        $region37: #{decoder_mlp_forward.1} parent=31 // pred_check
          %p168 = pneg %p79
        $region38: #{decoder_mlp_forward.1} parent=31 // pred_check_branch
          %170 = sbr.rel (%p168) target = $region40
        $region39: #{decoder_mlp_forward.1} parent=31 // pred_region
          %171 = dma.done [#allocation5], 2048
        $region40: #{decoder_mlp_forward.1} parent=31 // pred_fallthru
          _
        %p172 = scmp.lt.s32.totalorder %s16, 1
        %s173 = scalar_select %p172, %s16, 1
        %s174 = smul.addr %s173, 4
        %s175 = scalar_lea.vmem %s0, %s174
        %p176 = pneg %p37
        %p177 = pneg %p34
        %p178 = pneg %p58
        %p179 = pneg %p55
        %p180 = pneg %p79
        %p181 = pneg %p76
        %p182 = pneg %p105
        %p183 = pneg %p102
        %p184 = scmp.lt.s32.totalorder %s16, 1
        %s185 = scalar_select %p184, %s16, 1
        %s186 = smul.addr %s185, 4
        %s187 = scalar_lea.vmem %s3, %s186
        %p188 = scmp.lt.s32.totalorder %s16, 1
        %s189 = scalar_select %p188, %s16, 1
        %s190 = smul.addr %s189, 4
        %s191 = scalar_lea.vmem %s0, %s190
        %p192 = scmp.lt.s32.totalorder %s16, 1
        %s193 = scalar_select %p192, %s16, 1
        %s194 = smul.addr %s193, 4
        %s195 = scalar_lea.vmem %s3, %s194
        %v197 = vld [vmem:[%s191] sm:$0xf]
        %v198 = vld [vmem:[#allocation2] sm:$0xff]
        %v199 = vld [vmem:[#allocation2 + $0x8] sm:$0xff]
        %v200 = vld [vmem:[#allocation2 + $0x10] sm:$0xff]
        %v201 = vld [vmem:[#allocation2 + $0x18] sm:$0xff]
        %v202 = vld [vmem:[#allocation2 + $0x20] sm:$0xff]
        %v203 = vld [vmem:[#allocation2 + $0x28] sm:$0xff]
        %v210 = vunpack.c.l.b16 %v198
        %v211 = vunpack.c.h.b16 %v198
        %v212 = vunpack.c.l.b16 %v199
        %v213 = vunpack.c.h.b16 %v199
        %v214 = vunpack.c.l.b16 %v200
        %v215 = vunpack.c.h.b16 %v200
        %v216 = vunpack.c.l.b16 %v201
        %v217 = vunpack.c.h.b16 %v201
        %v218 = vunpack.c.l.b16 %v202
        %v219 = vunpack.c.h.b16 %v202
        %v220 = vunpack.c.l.b16 %v203
        %v221 = vunpack.c.h.b16 %v203
        %v222 = vpack.c.b16 %v212, %v210
        %v223 = vpack.c.b16 %v213, %v211
        %v224 = vpack.c.b16 %v216, %v214
        %v225 = vpack.c.b16 %v217, %v215
        %v226 = vpack.c.b16 %v220, %v218
        %v227 = vpack.c.b16 %v221, %v219
        %vm234 = vcmask 392192
        %v236 = vsel %vm234, %v197, 0
        %238 = vmatprep.subr.bf16.mxu0 0
        %239 = vmatpush1.bf16.msra.mxu0 0
        %240 = vmatprep.subr.bf16.mxu0 0
        %241 = vmatpush1.bf16.msra.mxu0 0
        %242 = vmatprep.subr.bf16.mxu0 0
        %243 = vmatpush1.bf16.msra.mxu0 0
        %244 = vmatprep.subr.bf16.mxu0 0
        %245 = vmatpush1.bf16.msra.mxu0 0
        %246 = vmatprep.subr.bf16.mxu0 0
        %247 = vmatpush1.bf16.msra.mxu0 0
        %248 = vmatprep.subr.bf16.mxu0 %v227
        %249 = vmatpush1.bf16.msra.mxu0 %v226
        %250 = vmatprep.subr.bf16.mxu0 %v225
        %251 = vmatpush1.bf16.msra.mxu0 %v224
        %252 = vmatprep.subr.bf16.mxu0 %v223
        %253 = vmatpush1.bf16.msra.mxu0 %v222
        %254 = vmatprep.subr.bf16.mxu0 0
        %255 = vmatpush2.bf16.msra.mxu0 0
        %256 = vmatprep.subr.bf16.mxu0 0
        %257 = vmatpush2.bf16.msra.mxu0 0
        %258 = vmatprep.subr.bf16.mxu0 0
        %259 = vmatpush2.bf16.msra.mxu0 0
        %260 = vmatprep.subr.bf16.mxu0 0
        %261 = vmatpush2.bf16.msra.mxu0 0
        %262 = vmatprep.subr.bf16.mxu0 0
        %263 = vmatpush2.bf16.msra.mxu0 0
        %264 = vmatprep.subr.bf16.mxu0 0
        %265 = vmatpush2.bf16.msra.mxu0 0
        %266 = vmatprep.subr.bf16.mxu0 0
        %267 = vmatpush2.bf16.msra.mxu0 0
        %268 = vmatprep.subr.bf16.mxu0 0
        %269 = vmatpush2.bf16.msra.mxu0 0
        %270 = vmatprep.mubr.bf16.mxu0 0
        %271 = vmatmul.mubr.bf16.gmra.mxu0 %v236
        %v272 = vpop.f32.mrf.mxu0
        %v273 = vadd.f32 0.0, %v272
        %v274 = vpop.f32.mrf.mxu0
        %v275 = vadd.f32 0.0, %v274
        %v276 = vpop.f32.mrf.mxu0
        %v277 = vpop.f32.mrf.mxu0
        %278 = vdwg.mxu0
        %v279 = vxor.u32 %v273, 2147483648
        %v280 = vxor.u32 %v275, 2147483648
        %v281 = vmul.f32 %v279, 1.442695
        %v282 = vpow.pop %v281
        %v283 = vmul.f32 %v280, 1.442695
        %v284 = vpow.pop %v283
        %v285 = vadd.f32 %v282, 1.0
        %v286 = vadd.f32 %v284, 1.0
        %v287 = vrcp.pop %v285
        %v288 = vmul.f32 1.0, %v287
        %v289 = vrcp.pop %v286
        %v290 = vmul.f32 1.0, %v289
        %v291 = vmul.f32 %v273, %v288
        %v292 = vmul.f32 %v275, %v290
        %v293 = vpack.c.bf16 %v291, %v291
        %v294 = vpack.c.bf16 %v292, %v292
        %v295 = vld [vmem:[#allocation4] sm:$0xf]
        %v296 = vld [vmem:[#allocation4 + $0x4] sm:$0xf]
        %v297 = vld [vmem:[#allocation4 + $0x8] sm:$0xf]
        %v298 = vld [vmem:[#allocation4 + $0xc] sm:$0xf]
        %v299 = vld [vmem:[#allocation4 + $0x10] sm:$0xf]
        %v300 = vld [vmem:[#allocation4 + $0x14] sm:$0xf]
        %v301 = vld [vmem:[#allocation4 + $0x18] sm:$0xf]
        %v302 = vld [vmem:[#allocation4 + $0x1c] sm:$0xf]
        %v303 = vld [vmem:[#allocation4 + $0x20] sm:$0xf]
        %v304 = vld [vmem:[#allocation4 + $0x24] sm:$0xf]
        %v305 = vld [vmem:[#allocation4 + $0x28] sm:$0xf]
        %v306 = vld [vmem:[#allocation4 + $0x2c] sm:$0xf]
        %v307 = vld [vmem:[#allocation4 + $0x30] sm:$0xf]
        %v308 = vld [vmem:[#allocation4 + $0x34] sm:$0xf]
        %v309 = vld [vmem:[#allocation4 + $0x38] sm:$0xf]
        %v310 = vld [vmem:[#allocation4 + $0x3c] sm:$0xf]
        %v311 = vld [vmem:[#allocation4 + $0x40] sm:$0xf]
        %v312 = vld [vmem:[#allocation4 + $0x44] sm:$0xf]
        %v313 = vld [vmem:[#allocation4 + $0x48] sm:$0xf]
        %v314 = vld [vmem:[#allocation4 + $0x4c] sm:$0xf]
        %v315 = vld [vmem:[#allocation4 + $0x50] sm:$0xf]
        %v316 = vld [vmem:[#allocation4 + $0x54] sm:$0xf]
        %v317 = vld [vmem:[#allocation4 + $0x58] sm:$0xf]
        %v318 = vld [vmem:[#allocation4 + $0x5c] sm:$0xf]
        %v319 = vld [vmem:[#allocation4 + $0x60] sm:$0xf]
        %v320 = vld [vmem:[#allocation4 + $0x64] sm:$0xf]
        %v321 = vld [vmem:[#allocation4 + $0x68] sm:$0xf]
        %v322 = vld [vmem:[#allocation4 + $0x6c] sm:$0xf]
        %v323 = vld [vmem:[#allocation4 + $0x70] sm:$0xf]
        %v324 = vld [vmem:[#allocation4 + $0x74] sm:$0xf]
        %v325 = vld [vmem:[#allocation4 + $0x78] sm:$0xf]
        %v326 = vld [vmem:[#allocation4 + $0x7c] sm:$0xf]
        %v359 = vunpack.c.l.b16 %v295
        %v360 = vunpack.c.l.b16 %v296
        %v361 = vunpack.c.l.b16 %v297
        %v362 = vunpack.c.l.b16 %v298
        %v363 = vunpack.c.l.b16 %v299
        %v364 = vunpack.c.l.b16 %v300
        %v365 = vunpack.c.l.b16 %v301
        %v366 = vunpack.c.l.b16 %v302
        %v367 = vunpack.c.l.b16 %v303
        %v368 = vunpack.c.l.b16 %v304
        %v369 = vunpack.c.l.b16 %v305
        %v370 = vunpack.c.l.b16 %v306
        %v371 = vunpack.c.l.b16 %v307
        %v372 = vunpack.c.l.b16 %v308
        %v373 = vunpack.c.l.b16 %v309
        %v374 = vunpack.c.l.b16 %v310
        %v375 = vunpack.c.l.b16 %v311
        %v376 = vunpack.c.l.b16 %v312
        %v377 = vunpack.c.l.b16 %v313
        %v378 = vunpack.c.l.b16 %v314
        %v379 = vunpack.c.l.b16 %v315
        %v380 = vunpack.c.l.b16 %v316
        %v381 = vunpack.c.l.b16 %v317
        %v382 = vunpack.c.l.b16 %v318
        %v383 = vunpack.c.l.b16 %v319
        %v384 = vunpack.c.l.b16 %v320
        %v385 = vunpack.c.l.b16 %v321
        %v386 = vunpack.c.l.b16 %v322
        %v387 = vunpack.c.l.b16 %v323
        %v388 = vunpack.c.l.b16 %v324
        %v389 = vunpack.c.l.b16 %v325
        %v390 = vunpack.c.l.b16 %v326
        %v391 = vpack.c.b16 %v360, %v359
        %v392 = vpack.c.b16 %v362, %v361
        %v393 = vpack.c.b16 %v364, %v363
        %v394 = vpack.c.b16 %v366, %v365
        %v395 = vpack.c.b16 %v368, %v367
        %v396 = vpack.c.b16 %v370, %v369
        %v397 = vpack.c.b16 %v372, %v371
        %v398 = vpack.c.b16 %v374, %v373
        %v399 = vpack.c.b16 %v376, %v375
        %v400 = vpack.c.b16 %v378, %v377
        %v401 = vpack.c.b16 %v380, %v379
        %v402 = vpack.c.b16 %v382, %v381
        %v403 = vpack.c.b16 %v384, %v383
        %v404 = vpack.c.b16 %v386, %v385
        %v405 = vpack.c.b16 %v388, %v387
        %v406 = vpack.c.b16 %v390, %v389
        %423 = vmatprep.subr.bf16.mxu0 0
        %424 = vmatpush1.bf16.msra.mxu0 %v398
        %425 = vmatprep.subr.bf16.mxu0 0
        %426 = vmatpush1.bf16.msra.mxu0 %v397
        %427 = vmatprep.subr.bf16.mxu0 0
        %428 = vmatpush1.bf16.msra.mxu0 %v396
        %429 = vmatprep.subr.bf16.mxu0 0
        %430 = vmatpush1.bf16.msra.mxu0 %v395
        %431 = vmatprep.subr.bf16.mxu0 0
        %432 = vmatpush1.bf16.msra.mxu0 %v394
        %433 = vmatprep.subr.bf16.mxu0 0
        %434 = vmatpush1.bf16.msra.mxu0 %v393
        %435 = vmatprep.subr.bf16.mxu0 0
        %436 = vmatpush1.bf16.msra.mxu0 %v392
        %437 = vmatprep.subr.bf16.mxu0 0
        %438 = vmatpush1.bf16.msra.mxu0 %v391
        %439 = vmatprep.subr.bf16.mxu0 0
        %440 = vmatpush2.bf16.msra.mxu0 %v406
        %441 = vmatprep.subr.bf16.mxu0 0
        %442 = vmatpush2.bf16.msra.mxu0 %v405
        %443 = vmatprep.subr.bf16.mxu0 0
        %444 = vmatpush2.bf16.msra.mxu0 %v404
        %445 = vmatprep.subr.bf16.mxu0 0
        %446 = vmatpush2.bf16.msra.mxu0 %v403
        %447 = vmatprep.subr.bf16.mxu0 0
        %448 = vmatpush2.bf16.msra.mxu0 %v402
        %449 = vmatprep.subr.bf16.mxu0 0
        %450 = vmatpush2.bf16.msra.mxu0 %v401
        %451 = vmatprep.subr.bf16.mxu0 0
        %452 = vmatpush2.bf16.msra.mxu0 %v400
        %453 = vmatprep.subr.bf16.mxu0 0
        %454 = vmatpush2.bf16.msra.mxu0 %v399
        %455 = vmatprep.mubr.bf16.mxu0 %v294
        %456 = vmatmul.mubr.bf16.gmra.mxu0 %v293
        %v457 = vpop.f32.mrf.mxu0
        %v458 = vadd.f32 0.0, %v457
        %v459 = vpop.f32.mrf.mxu0
        %v460 = vpop.f32.mrf.mxu0
        %v461 = vpop.f32.mrf.mxu0
        %462 = vdwg.mxu0
        %v463 = vpack.c.bf16 %v458, %v458
        %464 = vst [vmem:[%s195] sm:$0xf] %v463
        %p465 = scmp.lt.s32.totalorder %s16, 1
        %s466 = scalar_select %p465, %s16, 1
        %s467 = smul.addr %s466, 4
        %s468 = scalar_lea.vmem %s3, %s467
        // Predicated region
        $region41: #{decoder_mlp_forward.1} parent=31 // pred_check
          %p469 = pneg %p102
        $region42: #{decoder_mlp_forward.1} parent=31 // pred_check_branch
          %471 = sbr.rel (%p469) target = $region44
        $region43: #{decoder_mlp_forward.1} parent=31 // pred_region
          _
        $region44: #{decoder_mlp_forward.1} parent=31 // pred_fallthru
          _
      $region32: #{decoder_mlp_forward.1} parent=5 // pred_fallthru
        _
      %p472 = scmp.le.s32.totalorder 2, %s11
      // Predicated region
      $region45: #{decoder_mlp_forward.1} parent=5 // pred_check
        %p473 = pneg %p472
      $region46: #{decoder_mlp_forward.1} parent=5 // pred_check_branch
        %475 = sbr.rel (%p473) target = $region48
      $region47: #{decoder_mlp_forward.1} parent=5 // pred_region
        %s476 = ssub.s32 %s11, 2
        // Predicated region
        $region49: #{decoder_mlp_forward.1} parent=47 // pred_check
          %p477 = pneg %p108
        $region50: #{decoder_mlp_forward.1} parent=47 // pred_check_branch
          %479 = sbr.rel (%p477) target = $region52
        $region51: #{decoder_mlp_forward.1} parent=47 // pred_region
          %p480 = scmp.lt.s32.totalorder %s17, 1
          %s481 = scalar_select %p480, %s17, 1
          %s482 = smul.addr %s481, 4
          %s483 = scalar_lea.vmem %s3, %s482
        $region52: #{decoder_mlp_forward.1} parent=47 // pred_fallthru
          _
      $region48: #{decoder_mlp_forward.1} parent=5 // pred_fallthru
        _
    $region6: #{decoder_mlp_forward.1} parent=1 // loop_footer
      %s15 = sadd.s32 1, %s11
    $region7: #{decoder_mlp_forward.1} parent=1 // loop_footer_branch
      %10 = sbr.rel target = $region3
    $region8: #{decoder_mlp_forward.1} parent=1 // loop_exit
      _
    %484 = vsyncpa [#allocation3], 1
    %s485 = scalar_lea.sflag [#allocation3], 1
    %486 = vsyncpa %s485, 1
    %487 = vsyncpa [#allocation5], 1

</llo_original>
